<compile_context>
chip_gen: v6e
topology: v6e:2x2x1
jax: 0.10.0
libtpu: 0.0.40
codegen_flags: <defaults>
</compile_context>

<pallas_src>
import functools

import jax
import jax.numpy as jnp
from jax.experimental import pallas as pl
from jax.experimental.pallas import tpu as pltpu


def _rbf_linear_kernel(apply_sigmoid_rescale,
                       xT_ref, pre_ref, cent_ref, gamma_ref, w_ref, b_ref,
                       post_ref, oT_ref):
    """One fused (normalize?) -> RBF -> Linear -> (sigmoid*rescale?) stage.

    Transposed layout: batch is the last (lane) dimension everywhere.
      xT_ref:    (Fin,  TN)  input batch tile (transposed)
      pre_ref:   (Fin,  1)   elementwise normalization scale (ones if not 1st)
      cent_ref:  (H,    Fin) RBF centres
      gamma_ref: (H,    1)   1/sigma^2  ( = exp(-2*log_sigmas), precomputed )
      w_ref:     (Fout, H)   Linear weight
      b_ref:     (Fout, 1)   Linear bias
      post_ref:  (Fout, 1)   output rescale (ones if not last stage)
      oT_ref:    (Fout, TN)
    """
    x = xT_ref[...] * pre_ref[...]                      # (Fin, TN) normalize (VPU)
    fin, tn = x.shape
    h = cent_ref.shape[0]

    # Squared distances to centres, accumulated over the tiny feature axis with
    # 2D broadcasts (no 3D relayouts): d2[j, n] = sum_f (x[f,n] - c[j,f])^2.
    d2 = jnp.zeros((h, tn), dtype=jnp.float32)
    for f in range(fin):                                # Fin is 3: static unroll
        diff = x[f:f + 1, :] - cent_ref[:, f:f + 1]     # (1,TN)-(H,1) -> (H,TN)
        d2 = d2 + diff * diff

    # Gaussian basis with sqrt/divide folded away: exp(-(sqrt(d2)/sigma)^2)
    # == exp(-d2 / sigma^2).  One EUP exp per element.
    phi = jnp.exp(-d2 * gamma_ref[...])                 # (H, TN)

    # Linear layer: (Fout,H)@(H,TN) -- large TN streams through the MXU.
    out = jnp.dot(w_ref[...], phi, preferred_element_type=jnp.float32) + b_ref[...]

    if apply_sigmoid_rescale:
        out = jax.nn.sigmoid(out) * post_ref[...]

    oT_ref[...] = out.astype(oT_ref.dtype)


def rbf_network_forward(x, params, max_lm, max_s, max_ecc, block_n=512):
    """params: list of per-stage dicts
         {centres:(H,Fin), log_sigmas:(H,), W:(Fout,H), b:(Fout,)}.
    Tip: pick block_n so pl.cdiv(N, block_n) >= 2 on v7x (2 TensorCores)."""
    n = x.shape[0]
    n_layers = len(params)
    norm_w = jnp.array([1.0 / max_lm, 1.0 / max_s, 1.0 / max_ecc], jnp.float32)
    rescale = jnp.array([max_lm, max_s], jnp.float32)

    # Lane-dense batch tiles: block_n a multiple of 128; pad batch to full tiles.
    block_n = max(128, (block_n // 128) * 128)
    n_pad = block_n * pl.cdiv(n, block_n)

    # One transpose on entry; activations stay transposed (F, N) between stages.
    outT = jnp.pad(x.astype(jnp.float32), ((0, n_pad - n), (0, 0))).T   # (Fin, n_pad)

    # TODO(synk): if a config ever uses >1 (RBF, Linear) stage, fuse all stages
    # into a single pallas_call keeping the intermediate activation in VMEM.
    for li, p in enumerate(params):
        h, fin = p["centres"].shape
        fout = p["W"].shape[0]
        is_last = (li == n_layers - 1)

        # Hoist all per-stage constants out of the kernel (computed once by XLA).
        pre = (norm_w if li == 0 else jnp.ones((fin,), jnp.float32)).reshape(fin, 1)
        post = (rescale if is_last else jnp.ones((fout,), jnp.float32)).reshape(fout, 1)
        cent = p["centres"].astype(jnp.float32)                             # (H, Fin)
        gamma = jnp.exp(-2.0 * p["log_sigmas"].astype(jnp.float32)).reshape(h, 1)
        w = p["W"].astype(jnp.float32)                                      # (Fout, H)
        b = p["b"].reshape(fout, 1).astype(jnp.float32)

        cost = pl.CostEstimate(
            flops=n_pad * (3 * h * fin + 2 * h * fout),
            transcendentals=n_pad * (h + (fout if is_last else 0)),
            bytes_accessed=4 * (n_pad * (fin + fout) + h * fin + h + fout * h + 2 * fout),
        )

        kernel = functools.partial(_rbf_linear_kernel, is_last)
        outT = pl.pallas_call(
            kernel,
            out_shape=jax.ShapeDtypeStruct((fout, n_pad), jnp.float32),
            grid=(n_pad // block_n,),
            in_specs=[
                pl.BlockSpec((fin, block_n), lambda i: (0, i)),   # x^T: batch on lanes
                pl.BlockSpec((fin, 1), lambda i: (0, 0)),         # pre-scale
                pl.BlockSpec((h, fin), lambda i: (0, 0)),         # centres
                pl.BlockSpec((h, 1), lambda i: (0, 0)),           # 1/sigma^2
                pl.BlockSpec((fout, h), lambda i: (0, 0)),        # W
                pl.BlockSpec((fout, 1), lambda i: (0, 0)),        # bias
                pl.BlockSpec((fout, 1), lambda i: (0, 0)),        # post-scale
            ],
            out_specs=pl.BlockSpec((fout, block_n), lambda i: (0, i)),
            compiler_params=pltpu.CompilerParams(
                dimension_semantics=("parallel",)),
            cost_estimate=cost,
        )(outT, pre, cent, gamma, w, b, post)

    return outT[:, :n].T                                          # back to (N, Fout)


def rbf_network_reference(x, params, max_lm, max_s, max_ecc):
    """Pure-JAX reference mirroring the PyTorch forward exactly."""
    norm_w = jnp.array([1.0 / max_lm, 1.0 / max_s, 1.0 / max_ecc], jnp.float32)
    out = x.astype(jnp.float32) * norm_w
    for p in params:
        diff = out[:, None, :] - p["centres"][None, :, :]
        dist = jnp.sqrt(jnp.sum(diff * diff, axis=-1)) / jnp.exp(p["log_sigmas"])[None, :]
        phi = jnp.exp(-(dist ** 2))                               # gaussian basis
        out = phi @ p["W"].T + p["b"]
    return jax.nn.sigmoid(out) * jnp.array([max_lm, max_s], jnp.float32)


if __name__ == "__main__":
    # Config implied by the module: 3 input features (lm, s, ecc), 2 outputs (lm, s).
    layer_widths = [3, 2]
    layer_centres = [32]
    max_lm, max_s, max_ecc = 4.0, 2.0, 60.0

    key = jax.random.PRNGKey(0)
    k_x, k_c, k_w, k_b = jax.random.split(key, 4)

    N = 16
    x = jax.random.uniform(k_x, (N, layer_widths[0]), jnp.float32) \
        * jnp.array([max_lm, max_s, max_ecc], jnp.float32)

    # Deterministic synthetic parameters (shapes from RBF(in,out) + Linear(out, next)).
    params = []
    for i in range(len(layer_widths) - 1):
        fin, h, fout = layer_widths[i], layer_centres[i], layer_widths[i + 1]
        kc, kw, kb = jax.random.fold_in(k_c, i), jax.random.fold_in(k_w, i), jax.random.fold_in(k_b, i)
        params.append(dict(
            centres=jax.random.normal(kc, (h, fin), jnp.float32),      # RBF centres ~ N(0,1)
            log_sigmas=jnp.zeros((h,), jnp.float32),                   # RBF log_sigmas = 0
            W=0.1 * jax.random.normal(kw, (fout, h), jnp.float32),     # Linear weight
            b=0.01 * jax.random.normal(kb, (fout,), jnp.float32),      # Linear bias
        ))

    out = rbf_network_forward(x, params, max_lm, max_s, max_ecc, block_n=512)
    out = jax.block_until_ready(out)

    ref = rbf_network_reference(x, params, max_lm, max_s, max_ecc)
    assert out.shape == (N, layer_widths[-1])
    assert jnp.allclose(out, ref, atol=1e-5, rtol=1e-5), (out, ref)

    print("KERNEL_OK")
</pallas_src>

<mosaic_0001>
module attributes {stable_mosaic.version = 11 : i64} {
  func.func @_rbf_linear_kernel(%arg0: i32, %arg1: memref<3x512xf32, #tpu.memory_space<vmem>>, %arg2: memref<3x1xf32, #tpu.memory_space<vmem>>, %arg3: memref<32x3xf32, #tpu.memory_space<vmem>>, %arg4: memref<32x1xf32, #tpu.memory_space<vmem>>, %arg5: memref<2x32xf32, #tpu.memory_space<vmem>>, %arg6: memref<2x1xf32, #tpu.memory_space<vmem>>, %arg7: memref<2x1xf32, #tpu.memory_space<vmem>>, %arg8: memref<2x512xf32, #tpu.memory_space<vmem>>) attributes {dimension_semantics = [#tpu.dimension_semantics<parallel>], iteration_bounds = array<i64: 1>, scalar_prefetch = 0 : i64, scratch_operands = 0 : i64, tpu.core_type = #tpu.core_type<tc>, window_params = [{transform_indices = @transform_0, window_bounds = array<i64: 3, 512>}, {pipeline_mode = #tpu.pipeline_mode<synchronous>, transform_indices = @transform_1, window_bounds = array<i64: 3, 1>}, {pipeline_mode = #tpu.pipeline_mode<synchronous>, transform_indices = @transform_2, window_bounds = array<i64: 32, 3>}, {pipeline_mode = #tpu.pipeline_mode<synchronous>, transform_indices = @transform_3, window_bounds = array<i64: 32, 1>}, {pipeline_mode = #tpu.pipeline_mode<synchronous>, transform_indices = @transform_4, window_bounds = array<i64: 2, 32>}, {pipeline_mode = #tpu.pipeline_mode<synchronous>, transform_indices = @transform_5, window_bounds = array<i64: 2, 1>}, {pipeline_mode = #tpu.pipeline_mode<synchronous>, transform_indices = @transform_6, window_bounds = array<i64: 2, 1>}, {transform_indices = @transform_7, window_bounds = array<i64: 2, 512>}]} {
    %c0 = arith.constant 0 : index
    %c0_0 = arith.constant 0 : index
    %0 = vector.load %arg1[%c0, %c0_0] : memref<3x512xf32, #tpu.memory_space<vmem>>, vector<3x512xf32>
    %c0_1 = arith.constant 0 : index
    %c0_2 = arith.constant 0 : index
    %1 = vector.load %arg2[%c0_1, %c0_2] : memref<3x1xf32, #tpu.memory_space<vmem>>, vector<3x1xf32>
    %2 = vector.broadcast %1 : vector<3x1xf32> to vector<3x512xf32>
    %3 = arith.mulf %0, %2 : vector<3x512xf32>
    %cst = arith.constant 0.000000e+00 : f32
    %4 = vector.broadcast %cst : f32 to vector<32x512xf32>
    %5 = vector.extract_strided_slice %3 {offsets = [0, 0], sizes = [1, 512], strides = [1, 1]} : vector<3x512xf32> to vector<1x512xf32>
    %c0_3 = arith.constant 0 : index
    %c0_4 = arith.constant 0 : index
    %6 = vector.load %arg3[%c0_3, %c0_4] : memref<32x3xf32, #tpu.memory_space<vmem>>, vector<32x1xf32>
    %7 = vector.broadcast %5 : vector<1x512xf32> to vector<32x512xf32>
    %8 = vector.broadcast %6 : vector<32x1xf32> to vector<32x512xf32>
    %9 = arith.subf %7, %8 : vector<32x512xf32>
    %10 = arith.mulf %9, %9 : vector<32x512xf32>
    %11 = arith.addf %4, %10 : vector<32x512xf32>
    %12 = vector.extract_strided_slice %3 {offsets = [1, 0], sizes = [1, 512], strides = [1, 1]} : vector<3x512xf32> to vector<1x512xf32>
    %c0_5 = arith.constant 0 : index
    %c1 = arith.constant 1 : index
    %13 = vector.load %arg3[%c0_5, %c1] : memref<32x3xf32, #tpu.memory_space<vmem>>, vector<32x1xf32>
    %14 = vector.broadcast %12 : vector<1x512xf32> to vector<32x512xf32>
    %15 = vector.broadcast %13 : vector<32x1xf32> to vector<32x512xf32>
    %16 = arith.subf %14, %15 : vector<32x512xf32>
    %17 = arith.mulf %16, %16 : vector<32x512xf32>
    %18 = arith.addf %11, %17 : vector<32x512xf32>
    %19 = vector.extract_strided_slice %3 {offsets = [2, 0], sizes = [1, 512], strides = [1, 1]} : vector<3x512xf32> to vector<1x512xf32>
    %c0_6 = arith.constant 0 : index
    %c2 = arith.constant 2 : index
    %20 = vector.load %arg3[%c0_6, %c2] : memref<32x3xf32, #tpu.memory_space<vmem>>, vector<32x1xf32>
    %21 = vector.broadcast %19 : vector<1x512xf32> to vector<32x512xf32>
    %22 = vector.broadcast %20 : vector<32x1xf32> to vector<32x512xf32>
    %23 = arith.subf %21, %22 : vector<32x512xf32>
    %24 = arith.mulf %23, %23 : vector<32x512xf32>
    %25 = arith.addf %18, %24 : vector<32x512xf32>
    %cst_7 = arith.constant 0.000000e+00 : f32
    %26 = vector.broadcast %cst_7 : f32 to vector<32x512xf32>
    %27 = arith.subf %26, %25 : vector<32x512xf32>
    %c0_8 = arith.constant 0 : index
    %c0_9 = arith.constant 0 : index
    %28 = vector.load %arg4[%c0_8, %c0_9] : memref<32x1xf32, #tpu.memory_space<vmem>>, vector<32x1xf32>
    %29 = vector.broadcast %28 : vector<32x1xf32> to vector<32x512xf32>
    %30 = arith.mulf %27, %29 : vector<32x512xf32>
    %31 = math.exp %30 : vector<32x512xf32>
    %c0_10 = arith.constant 0 : index
    %c0_11 = arith.constant 0 : index
    %32 = vector.load %arg5[%c0_10, %c0_11] : memref<2x32xf32, #tpu.memory_space<vmem>>, vector<2x32xf32>
    %cst_12 = arith.constant dense<0.000000e+00> : vector<2x512xf32>
    %33 = tpu.matmul %32, %31, %cst_12 {dimension_numbers = #tpu.dot_dimension_numbers<[1], [0], [0], [1], [0, 0, 1, 1], [], []>} : vector<2x32xf32>, vector<32x512xf32>, vector<2x512xf32> -> vector<2x512xf32>
    %c0_13 = arith.constant 0 : index
    %c0_14 = arith.constant 0 : index
    %34 = vector.load %arg6[%c0_13, %c0_14] : memref<2x1xf32, #tpu.memory_space<vmem>>, vector<2x1xf32>
    %35 = vector.broadcast %34 : vector<2x1xf32> to vector<2x512xf32>
    %36 = arith.addf %33, %35 : vector<2x512xf32>
    %37 = arith.negf %36 : vector<2x512xf32>
    %38 = math.exp %37 : vector<2x512xf32>
    %cst_15 = arith.constant 1.000000e+00 : f32
    %39 = vector.broadcast %cst_15 : f32 to vector<2x512xf32>
    %40 = arith.addf %39, %38 : vector<2x512xf32>
    %41 = arith.divf %39, %40 : vector<2x512xf32>
    %c0_16 = arith.constant 0 : index
    %c0_17 = arith.constant 0 : index
    %42 = vector.load %arg7[%c0_16, %c0_17] : memref<2x1xf32, #tpu.memory_space<vmem>>, vector<2x1xf32>
    %43 = vector.broadcast %42 : vector<2x1xf32> to vector<2x512xf32>
    %44 = arith.mulf %41, %43 : vector<2x512xf32>
    %c0_18 = arith.constant 0 : index
    %c0_19 = arith.constant 0 : index
    %45 = vector.load %arg8[%c0_18, %c0_19] : memref<2x512xf32, #tpu.memory_space<vmem>>, vector<2x512xf32>
    tpu.vector_store %arg8[%c0_18, %c0_19], %44 {strides = array<i32>} : memref<2x512xf32, #tpu.memory_space<vmem>>, vector<2x512xf32>,
    return
  }
  func.func @transform_0(%arg0: i32) -> (i32, i32) {
    %c0_i32 = arith.constant 0 : i32
    %c0_i32_0 = arith.constant 0 : i32
    return %c0_i32, %arg0 : i32, i32
  }
  func.func @transform_1(%arg0: i32) -> (i32, i32) {
    %c0_i32 = arith.constant 0 : i32
    %c0_i32_0 = arith.constant 0 : i32
    %c0_i32_1 = arith.constant 0 : i32
    return %c0_i32, %c0_i32_0 : i32, i32
  }
  func.func @transform_2(%arg0: i32) -> (i32, i32) {
    %c0_i32 = arith.constant 0 : i32
    %c0_i32_0 = arith.constant 0 : i32
    %c0_i32_1 = arith.constant 0 : i32
    return %c0_i32, %c0_i32_0 : i32, i32
  }
  func.func @transform_3(%arg0: i32) -> (i32, i32) {
    %c0_i32 = arith.constant 0 : i32
    %c0_i32_0 = arith.constant 0 : i32
    %c0_i32_1 = arith.constant 0 : i32
    return %c0_i32, %c0_i32_0 : i32, i32
  }
  func.func @transform_4(%arg0: i32) -> (i32, i32) {
    %c0_i32 = arith.constant 0 : i32
    %c0_i32_0 = arith.constant 0 : i32
    %c0_i32_1 = arith.constant 0 : i32
    return %c0_i32, %c0_i32_0 : i32, i32
  }
  func.func @transform_5(%arg0: i32) -> (i32, i32) {
    %c0_i32 = arith.constant 0 : i32
    %c0_i32_0 = arith.constant 0 : i32
    %c0_i32_1 = arith.constant 0 : i32
    return %c0_i32, %c0_i32_0 : i32, i32
  }
  func.func @transform_6(%arg0: i32) -> (i32, i32) {
    %c0_i32 = arith.constant 0 : i32
    %c0_i32_0 = arith.constant 0 : i32
    %c0_i32_1 = arith.constant 0 : i32
    return %c0_i32, %c0_i32_0 : i32, i32
  }
  func.func @transform_7(%arg0: i32) -> (i32, i32) {
    %c0_i32 = arith.constant 0 : i32
    %c0_i32_0 = arith.constant 0 : i32
    return %c0_i32, %arg0 : i32, i32
  }
}

</mosaic_0001>

<llo_original>
// kernel: tpu_custom_call.1
$region0: #{tpu_custom_call.1}
  #allocation0 [shape = 'u32[]', space=smem, size = 0x4, offset = 0x4, fixed_abs, tag = 'smem constant byte address 0x4 - core index']
  #allocation1 [shape = 'u32[144,128]{1,0:T(1,128)}', space=vmem, size = 0x12000, scoped, tag = 'internal scratch']
  %s0 = inlined_call_operand.vmem [shape: f32[3,512], index: 0, kind: input, shape index: {}]
  %s1 = inlined_call_operand.vmem [shape: f32[3,1], index: 1, kind: input, shape index: {}]
  %s2 = inlined_call_operand.vmem [shape: f32[32,3], index: 2, kind: input, shape index: {}]
  %s3 = inlined_call_operand.vmem [shape: f32[32,1], index: 3, kind: input, shape index: {}]
  %s4 = inlined_call_operand.vmem [shape: f32[2,32], index: 4, kind: input, shape index: {}]
  %s5 = inlined_call_operand.vmem [shape: f32[2,1], index: 5, kind: input, shape index: {}]
  %s6 = inlined_call_operand.vmem [shape: f32[2,1], index: 6, kind: input, shape index: {}]
  %s7 = inlined_call_operand.hbm [shape: f32[2,512], index: 7, kind: output, shape index: {}]
  %s8 = sld [smem:[#allocation0]]
  $region38: #{tpu_custom_call.1} parent=0
    _
  %s10 = ssub.s32 1, %s8
  %s11 = scalar_select 0, %s10, %s8
  $region1: #{tpu_custom_call.1} parent=0
    #allocation2 [shape = 'u8[4096]{0}', space=vmem, size = 0x1000, scoped, tag = 'output window, operand 0, single buffered']
    #allocation3 [shape = 's32[1]{0}', space=sflag, size = 0x4, scoped, tag = 'scoped memory for tpu_custom_call.1']
    %12 = vsyncpa [#allocation3], 0
    // Predicated region
    $region2: #{tpu_custom_call.1} parent=1 // pred_check
      _
    $region3: #{tpu_custom_call.1} parent=1 // pred_check_branch
      %14 = sbr.rel (0) target = $region5
    $region4: #{tpu_custom_call.1} parent=1 // pred_region
      _
    $region5: #{tpu_custom_call.1} parent=1 // pred_fallthru
      _
    // Predicated region
    $region6: #{tpu_custom_call.1} parent=1 // pred_check
      _
    $region7: #{tpu_custom_call.1} parent=1 // pred_check_branch
      %16 = sbr.rel (0) target = $region9
    $region8: #{tpu_custom_call.1} parent=1 // pred_region
      _
    $region9: #{tpu_custom_call.1} parent=1 // pred_fallthru
      _
    // Predicated region
    $region10: #{tpu_custom_call.1} parent=1 // pred_check
      _
    $region11: #{tpu_custom_call.1} parent=1 // pred_check_branch
      %18 = sbr.rel (0) target = $region13
    $region12: #{tpu_custom_call.1} parent=1 // pred_region
      _
    $region13: #{tpu_custom_call.1} parent=1 // pred_fallthru
      _
    // Predicated region
    $region14: #{tpu_custom_call.1} parent=1 // pred_check
      _
    $region15: #{tpu_custom_call.1} parent=1 // pred_check_branch
      %20 = sbr.rel (0) target = $region17
    $region16: #{tpu_custom_call.1} parent=1 // pred_region
      _
    $region17: #{tpu_custom_call.1} parent=1 // pred_fallthru
      _
    // Predicated region
    $region18: #{tpu_custom_call.1} parent=1 // pred_check
      _
    $region19: #{tpu_custom_call.1} parent=1 // pred_check_branch
      %22 = sbr.rel (0) target = $region21
    $region20: #{tpu_custom_call.1} parent=1 // pred_region
      _
    $region21: #{tpu_custom_call.1} parent=1 // pred_fallthru
      _
    // Predicated region
    $region22: #{tpu_custom_call.1} parent=1 // pred_check
      _
    $region23: #{tpu_custom_call.1} parent=1 // pred_check_branch
      %24 = sbr.rel (0) target = $region25
    $region24: #{tpu_custom_call.1} parent=1 // pred_region
      _
    $region25: #{tpu_custom_call.1} parent=1 // pred_fallthru
      _
    // Predicated region
    $region26: #{tpu_custom_call.1} parent=1 // pred_check
      _
    $region27: #{tpu_custom_call.1} parent=1 // pred_check_branch
      %26 = sbr.rel (0) target = $region29
    $region28: #{tpu_custom_call.1} parent=1 // pred_region
      _
    $region29: #{tpu_custom_call.1} parent=1 // pred_fallthru
      _
    %v27 = vld [vmem:[%s0] sm:$0x77]
    %v28 = vld [vmem:[%s0 + $0x8] sm:$0x77]
    %v29 = vld [vmem:[%s1] sm:$0x7]
    %31 = vset.pattern.permute.xlu0 0
    %32 = vperm.xlu0 %31, %v29
    %v33 = vpop.permute.xlu0 %32
    %v35 = vunpack.c.l.s4 839922192
    %v36 = vunpack.c.0.s8 %v35
    %v37 = vlaneseq
    %v38 = vshrl.u32 %v37, 7
    %v39 = vsub.s32 %v36, %v38
    %v40 = vrot.slane %v33, %v39
    %v42 = vmul.f32 %v27, %v40
    %v43 = vmul.f32 %v28, %v40
    %v44 = vld [vmem:[%s2] sm:$0xff]
    %v45 = vld [vmem:[%s2 + $0x8] sm:$0xff]
    %v46 = vld [vmem:[%s2 + $0x10] sm:$0xff]
    %v47 = vld [vmem:[%s2 + $0x18] sm:$0xff]
    %v50 = vlaneseq
    %v51 = vshrl.u32 %v50, 7
    %v52 = vsub.s32 0, %v51
    %v53 = vrot.slane %v42, %v52
    %v54 = vlaneseq
    %v55 = vshrl.u32 %v54, 7
    %v56 = vsub.s32 4, %v55
    %v57 = vrot.slane %v42, %v56
    %v58 = vlaneseq
    %v59 = vshrl.u32 %v58, 7
    %v60 = vsub.s32 0, %v59
    %v61 = vrot.slane %v43, %v60
    %v62 = vlaneseq
    %v63 = vshrl.u32 %v62, 7
    %v64 = vsub.s32 4, %v63
    %v65 = vrot.slane %v43, %v64
    %v70 = vlaneseq
    %v71 = vshrl.u32 %v70, 7
    %v72 = vsub.s32 0, %v71
    %v73 = vrot.slane %v53, %v72
    %v74 = vlaneseq
    %v75 = vshrl.u32 %v74, 7
    %v76 = vsub.s32 0, %v75
    %v77 = vrot.slane %v57, %v76
    %v78 = vlaneseq
    %v79 = vshrl.u32 %v78, 7
    %v80 = vsub.s32 0, %v79
    %v81 = vrot.slane %v61, %v80
    %v82 = vlaneseq
    %v83 = vshrl.u32 %v82, 7
    %v84 = vsub.s32 0, %v83
    %v85 = vrot.slane %v65, %v84
    %87 = vset.pattern.permute.xlu0 0
    %88 = vperm.xlu0 %87, %v44
    %v89 = vpop.permute.xlu0 %88
    %92 = vset.pattern.permute.xlu0 0
    %93 = vperm.xlu0 %92, %v45
    %v94 = vpop.permute.xlu0 %93
    %97 = vset.pattern.permute.xlu0 0
    %98 = vperm.xlu0 %97, %v46
    %v99 = vpop.permute.xlu0 %98
    %102 = vset.pattern.permute.xlu0 0
    %103 = vperm.xlu0 %102, %v47
    %v104 = vpop.permute.xlu0 %103
    %v106 = vsub.f32 %v73, %v89
    %v107 = vsub.f32 %v77, %v89
    %v108 = vsub.f32 %v81, %v89
    %v109 = vsub.f32 %v85, %v89
    %v110 = vsub.f32 %v73, %v94
    %v111 = vsub.f32 %v77, %v94
    %v112 = vsub.f32 %v81, %v94
    %v113 = vsub.f32 %v85, %v94
    %v114 = vsub.f32 %v73, %v99
    %v115 = vsub.f32 %v77, %v99
    %v116 = vsub.f32 %v81, %v99
    %v117 = vsub.f32 %v85, %v99
    %v118 = vsub.f32 %v73, %v104
    %v119 = vsub.f32 %v77, %v104
    %v120 = vsub.f32 %v81, %v104
    %v121 = vsub.f32 %v85, %v104
    %v122 = vmul.f32 %v106, %v106
    %v123 = vmul.f32 %v107, %v107
    %v124 = vmul.f32 %v108, %v108
    %v125 = vmul.f32 %v109, %v109
    %v126 = vmul.f32 %v110, %v110
    %v127 = vmul.f32 %v111, %v111
    %v128 = vmul.f32 %v112, %v112
    %v129 = vmul.f32 %v113, %v113
    %v130 = vmul.f32 %v114, %v114
    %v131 = vmul.f32 %v115, %v115
    %v132 = vmul.f32 %v116, %v116
    %v133 = vmul.f32 %v117, %v117
    %v134 = vmul.f32 %v118, %v118
    %v135 = vmul.f32 %v119, %v119
    %v136 = vmul.f32 %v120, %v120
    %v137 = vmul.f32 %v121, %v121
    %v138 = vadd.f32 %v122, 0.0
    %v139 = vadd.f32 %v123, 0.0
    %v140 = vadd.f32 %v124, 0.0
    %v141 = vadd.f32 %v125, 0.0
    %v142 = vadd.f32 %v126, 0.0
    %v143 = vadd.f32 %v127, 0.0
    %v144 = vadd.f32 %v128, 0.0
    %v145 = vadd.f32 %v129, 0.0
    %v146 = vadd.f32 %v130, 0.0
    %v147 = vadd.f32 %v131, 0.0
    %v148 = vadd.f32 %v132, 0.0
    %v149 = vadd.f32 %v133, 0.0
    %v150 = vadd.f32 %v134, 0.0
    %v151 = vadd.f32 %v135, 0.0
    %v152 = vadd.f32 %v136, 0.0
    %v153 = vadd.f32 %v137, 0.0
    %v154 = vlaneseq
    %v155 = vshrl.u32 %v154, 7
    %v156 = vsub.s32 1, %v155
    %v157 = vrot.slane %v42, %v156
    %v158 = vlaneseq
    %v159 = vshrl.u32 %v158, 7
    %v160 = vsub.s32 5, %v159
    %v161 = vrot.slane %v42, %v160
    %v162 = vlaneseq
    %v163 = vshrl.u32 %v162, 7
    %v164 = vsub.s32 1, %v163
    %v165 = vrot.slane %v43, %v164
    %v166 = vlaneseq
    %v167 = vshrl.u32 %v166, 7
    %v168 = vsub.s32 5, %v167
    %v169 = vrot.slane %v43, %v168
    %v174 = vlaneseq
    %v175 = vshrl.u32 %v174, 7
    %v176 = vsub.s32 1, %v175
    %v177 = vrot.slane %v157, %v176
    %v178 = vlaneseq
    %v179 = vshrl.u32 %v178, 7
    %v180 = vsub.s32 1, %v179
    %v181 = vrot.slane %v161, %v180
    %v182 = vlaneseq
    %v183 = vshrl.u32 %v182, 7
    %v184 = vsub.s32 1, %v183
    %v185 = vrot.slane %v165, %v184
    %v186 = vlaneseq
    %v187 = vshrl.u32 %v186, 7
    %v188 = vsub.s32 1, %v187
    %v189 = vrot.slane %v169, %v188
    %190 = vset.pattern.permute.xlu0 1
    %191 = vperm.xlu0 %190, %v44
    %v192 = vpop.permute.xlu0 %191
    %194 = vset.pattern.permute.xlu0 1
    %195 = vperm.xlu0 %194, %v45
    %v196 = vpop.permute.xlu0 %195
    %198 = vset.pattern.permute.xlu0 1
    %199 = vperm.xlu0 %198, %v46
    %v200 = vpop.permute.xlu0 %199
    %202 = vset.pattern.permute.xlu0 1
    %203 = vperm.xlu0 %202, %v47
    %v204 = vpop.permute.xlu0 %203
    %v206 = vsub.f32 %v177, %v192
    %v207 = vsub.f32 %v181, %v192
    %v208 = vsub.f32 %v185, %v192
    %v209 = vsub.f32 %v189, %v192
    %v210 = vsub.f32 %v177, %v196
    %v211 = vsub.f32 %v181, %v196
    %v212 = vsub.f32 %v185, %v196
    %v213 = vsub.f32 %v189, %v196
    %v214 = vsub.f32 %v177, %v200
    %v215 = vsub.f32 %v181, %v200
    %v216 = vsub.f32 %v185, %v200
    %v217 = vsub.f32 %v189, %v200
    %v218 = vsub.f32 %v177, %v204
    %v219 = vsub.f32 %v181, %v204
    %v220 = vsub.f32 %v185, %v204
    %v221 = vsub.f32 %v189, %v204
    %v222 = vmul.f32 %v206, %v206
    %v223 = vmul.f32 %v207, %v207
    %v224 = vmul.f32 %v208, %v208
    %v225 = vmul.f32 %v209, %v209
    %v226 = vmul.f32 %v210, %v210
    %v227 = vmul.f32 %v211, %v211
    %v228 = vmul.f32 %v212, %v212
    %v229 = vmul.f32 %v213, %v213
    %v230 = vmul.f32 %v214, %v214
    %v231 = vmul.f32 %v215, %v215
    %v232 = vmul.f32 %v216, %v216
    %v233 = vmul.f32 %v217, %v217
    %v234 = vmul.f32 %v218, %v218
    %v235 = vmul.f32 %v219, %v219
    %v236 = vmul.f32 %v220, %v220
    %v237 = vmul.f32 %v221, %v221
    %v238 = vadd.f32 %v138, %v222
    %v239 = vadd.f32 %v139, %v223
    %v240 = vadd.f32 %v140, %v224
    %v241 = vadd.f32 %v141, %v225
    %v242 = vadd.f32 %v142, %v226
    %v243 = vadd.f32 %v143, %v227
    %v244 = vadd.f32 %v144, %v228
    %v245 = vadd.f32 %v145, %v229
    %v246 = vadd.f32 %v146, %v230
    %v247 = vadd.f32 %v147, %v231
    %v248 = vadd.f32 %v148, %v232
    %v249 = vadd.f32 %v149, %v233
    %v250 = vadd.f32 %v150, %v234
    %v251 = vadd.f32 %v151, %v235
    %v252 = vadd.f32 %v152, %v236
    %v253 = vadd.f32 %v153, %v237
    %v254 = vlaneseq
    %v255 = vshrl.u32 %v254, 7
    %v256 = vsub.s32 2, %v255
    %v257 = vrot.slane %v42, %v256
    %v258 = vlaneseq
    %v259 = vshrl.u32 %v258, 7
    %v260 = vsub.s32 6, %v259
    %v261 = vrot.slane %v42, %v260
    %v262 = vlaneseq
    %v263 = vshrl.u32 %v262, 7
    %v264 = vsub.s32 2, %v263
    %v265 = vrot.slane %v43, %v264
    %v266 = vlaneseq
    %v267 = vshrl.u32 %v266, 7
    %v268 = vsub.s32 6, %v267
    %v269 = vrot.slane %v43, %v268
    %v274 = vlaneseq
    %v275 = vshrl.u32 %v274, 7
    %v276 = vsub.s32 2, %v275
    %v277 = vrot.slane %v257, %v276
    %v278 = vlaneseq
    %v279 = vshrl.u32 %v278, 7
    %v280 = vsub.s32 2, %v279
    %v281 = vrot.slane %v261, %v280
    %v282 = vlaneseq
    %v283 = vshrl.u32 %v282, 7
    %v284 = vsub.s32 2, %v283
    %v285 = vrot.slane %v265, %v284
    %v286 = vlaneseq
    %v287 = vshrl.u32 %v286, 7
    %v288 = vsub.s32 2, %v287
    %v289 = vrot.slane %v269, %v288
    %290 = vset.pattern.permute.xlu0 2
    %291 = vperm.xlu0 %290, %v44
    %v292 = vpop.permute.xlu0 %291
    %294 = vset.pattern.permute.xlu0 2
    %295 = vperm.xlu0 %294, %v45
    %v296 = vpop.permute.xlu0 %295
    %298 = vset.pattern.permute.xlu0 2
    %299 = vperm.xlu0 %298, %v46
    %v300 = vpop.permute.xlu0 %299
    %302 = vset.pattern.permute.xlu0 2
    %303 = vperm.xlu0 %302, %v47
    %v304 = vpop.permute.xlu0 %303
    %v306 = vsub.f32 %v277, %v292
    %v307 = vsub.f32 %v281, %v292
    %v308 = vsub.f32 %v285, %v292
    %v309 = vsub.f32 %v289, %v292
    %v310 = vsub.f32 %v277, %v296
    %v311 = vsub.f32 %v281, %v296
    %v312 = vsub.f32 %v285, %v296
    %v313 = vsub.f32 %v289, %v296
    %v314 = vsub.f32 %v277, %v300
    %v315 = vsub.f32 %v281, %v300
    %v316 = vsub.f32 %v285, %v300
    %v317 = vsub.f32 %v289, %v300
    %v318 = vsub.f32 %v277, %v304
    %v319 = vsub.f32 %v281, %v304
    %v320 = vsub.f32 %v285, %v304
    %v321 = vsub.f32 %v289, %v304
    %v322 = vmul.f32 %v306, %v306
    %v323 = vmul.f32 %v307, %v307
    %v324 = vmul.f32 %v308, %v308
    %v325 = vmul.f32 %v309, %v309
    %v326 = vmul.f32 %v310, %v310
    %v327 = vmul.f32 %v311, %v311
    %v328 = vmul.f32 %v312, %v312
    %v329 = vmul.f32 %v313, %v313
    %v330 = vmul.f32 %v314, %v314
    %v331 = vmul.f32 %v315, %v315
    %v332 = vmul.f32 %v316, %v316
    %v333 = vmul.f32 %v317, %v317
    %v334 = vmul.f32 %v318, %v318
    %v335 = vmul.f32 %v319, %v319
    %v336 = vmul.f32 %v320, %v320
    %v337 = vmul.f32 %v321, %v321
    %v338 = vadd.f32 %v238, %v322
    %v339 = vadd.f32 %v239, %v323
    %v340 = vadd.f32 %v240, %v324
    %v341 = vadd.f32 %v241, %v325
    %v342 = vadd.f32 %v242, %v326
    %v343 = vadd.f32 %v243, %v327
    %v344 = vadd.f32 %v244, %v328
    %v345 = vadd.f32 %v245, %v329
    %v346 = vadd.f32 %v246, %v330
    %v347 = vadd.f32 %v247, %v331
    %v348 = vadd.f32 %v248, %v332
    %v349 = vadd.f32 %v249, %v333
    %v350 = vadd.f32 %v250, %v334
    %v351 = vadd.f32 %v251, %v335
    %v352 = vadd.f32 %v252, %v336
    %v353 = vadd.f32 %v253, %v337
    %v354 = vsub.f32 0.0, %v338
    %v355 = vsub.f32 0.0, %v339
    %v356 = vsub.f32 0.0, %v340
    %v357 = vsub.f32 0.0, %v341
    %v358 = vsub.f32 0.0, %v342
    %v359 = vsub.f32 0.0, %v343
    %v360 = vsub.f32 0.0, %v344
    %v361 = vsub.f32 0.0, %v345
    %v362 = vsub.f32 0.0, %v346
    %v363 = vsub.f32 0.0, %v347
    %v364 = vsub.f32 0.0, %v348
    %v365 = vsub.f32 0.0, %v349
    %v366 = vsub.f32 0.0, %v350
    %v367 = vsub.f32 0.0, %v351
    %v368 = vsub.f32 0.0, %v352
    %v369 = vsub.f32 0.0, %v353
    %v370 = vld [vmem:[%s3] sm:$0xff]
    %v371 = vld [vmem:[%s3 + $0x8] sm:$0xff]
    %v372 = vld [vmem:[%s3 + $0x10] sm:$0xff]
    %v373 = vld [vmem:[%s3 + $0x18] sm:$0xff]
    %375 = vset.pattern.permute.xlu0 0
    %376 = vperm.xlu0 %375, %v370
    %v377 = vpop.permute.xlu0 %376
    %380 = vset.pattern.permute.xlu0 0
    %381 = vperm.xlu0 %380, %v371
    %v382 = vpop.permute.xlu0 %381
    %385 = vset.pattern.permute.xlu0 0
    %386 = vperm.xlu0 %385, %v372
    %v387 = vpop.permute.xlu0 %386
    %390 = vset.pattern.permute.xlu0 0
    %391 = vperm.xlu0 %390, %v373
    %v392 = vpop.permute.xlu0 %391
    %v394 = vmul.f32 %v354, %v377
    %v395 = vmul.f32 %v355, %v377
    %v396 = vmul.f32 %v356, %v377
    %v397 = vmul.f32 %v357, %v377
    %v398 = vmul.f32 %v358, %v382
    %v399 = vmul.f32 %v359, %v382
    %v400 = vmul.f32 %v360, %v382
    %v401 = vmul.f32 %v361, %v382
    %v402 = vmul.f32 %v362, %v387
    %v403 = vmul.f32 %v363, %v387
    %v404 = vmul.f32 %v364, %v387
    %v405 = vmul.f32 %v365, %v387
    %v406 = vmul.f32 %v366, %v392
    %v407 = vmul.f32 %v367, %v392
    %v408 = vmul.f32 %v368, %v392
    %v409 = vmul.f32 %v369, %v392
    %v410 = vmul.f32 %v394, 1.442695
    %v411 = vpow.pop %v410
    %v412 = vmul.f32 %v395, 1.442695
    %v413 = vpow.pop %v412
    %v414 = vmul.f32 %v396, 1.442695
    %v415 = vpow.pop %v414
    %v416 = vmul.f32 %v397, 1.442695
    %v417 = vpow.pop %v416
    %v418 = vmul.f32 %v398, 1.442695
    %v419 = vpow.pop %v418
    %v420 = vmul.f32 %v399, 1.442695
    %v421 = vpow.pop %v420
    %v422 = vmul.f32 %v400, 1.442695
    %v423 = vpow.pop %v422
    %v424 = vmul.f32 %v401, 1.442695
    %v425 = vpow.pop %v424
    %v426 = vmul.f32 %v402, 1.442695
    %v427 = vpow.pop %v426
    %v428 = vmul.f32 %v403, 1.442695
    %v429 = vpow.pop %v428
    %v430 = vmul.f32 %v404, 1.442695
    %v431 = vpow.pop %v430
    %v432 = vmul.f32 %v405, 1.442695
    %v433 = vpow.pop %v432
    %v434 = vmul.f32 %v406, 1.442695
    %v435 = vpow.pop %v434
    %v436 = vmul.f32 %v407, 1.442695
    %v437 = vpow.pop %v436
    %v438 = vmul.f32 %v408, 1.442695
    %v439 = vpow.pop %v438
    %v440 = vmul.f32 %v409, 1.442695
    %v441 = vpow.pop %v440
    %v442 = vld [vmem:[%s4] sm:$0x3]
    %v443 = vld [vmem:[%s5] sm:$0x3]
    %445 = vset.pattern.permute.xlu0 0
    %446 = vperm.xlu0 %445, %v443
    %v447 = vpop.permute.xlu0 %446
    %vm449 = vcmask 261120
    %v451 = vsel %vm449, %v442, 0
    %453 = vmatprep.subr.mxu0 0.0
    %454 = vmatpush1.msra.mxu0 0.0
    %455 = vmatprep.subr.mxu0 0.0
    %456 = vmatpush1.msra.mxu0 0.0
    %457 = vmatprep.subr.mxu0 0.0
    %458 = vmatpush1.msra.mxu0 0.0
    %459 = vmatprep.subr.mxu0 0.0
    %460 = vmatpush1.msra.mxu0 0.0
    %461 = vmatprep.subr.mxu0 0.0
    %462 = vmatpush1.msra.mxu0 0.0
    %463 = vmatprep.subr.mxu0 0.0
    %464 = vmatpush1.msra.mxu0 0.0
    %465 = vmatprep.subr.mxu0 0.0
    %466 = vmatpush1.msra.mxu0 0.0
    %467 = vmatprep.subr.mxu0 0.0
    %468 = vmatpush1.msra.mxu0 0.0
    %469 = vmatprep.subr.mxu0 0.0
    %470 = vmatpush1.msra.mxu0 0.0
    %471 = vmatprep.subr.mxu0 0.0
    %472 = vmatpush1.msra.mxu0 0.0
    %473 = vmatprep.subr.mxu0 0.0
    %474 = vmatpush1.msra.mxu0 0.0
    %475 = vmatprep.subr.mxu0 0.0
    %476 = vmatpush1.msra.mxu0 0.0
    %477 = vmatprep.subr.mxu0 %v437
    %478 = vmatpush1.msra.mxu0 %v435
    %479 = vmatprep.subr.mxu0 %v429
    %480 = vmatpush1.msra.mxu0 %v427
    %481 = vmatprep.subr.mxu0 %v421
    %482 = vmatpush1.msra.mxu0 %v419
    %483 = vmatprep.subr.mxu0 %v413
    %484 = vmatpush1.msra.mxu0 %v411
    %485 = vmatprep.subr.mxu0 0.0
    %486 = vmatpush2.msra.mxu0 0.0
    %487 = vmatprep.subr.mxu0 0.0
    %488 = vmatpush2.msra.mxu0 0.0
    %489 = vmatprep.subr.mxu0 0.0
    %490 = vmatpush2.msra.mxu0 0.0
    %491 = vmatprep.subr.mxu0 0.0
    %492 = vmatpush2.msra.mxu0 0.0
    %493 = vmatprep.subr.mxu0 0.0
    %494 = vmatpush2.msra.mxu0 0.0
    %495 = vmatprep.subr.mxu0 0.0
    %496 = vmatpush2.msra.mxu0 0.0
    %497 = vmatprep.subr.mxu0 0.0
    %498 = vmatpush2.msra.mxu0 0.0
    %499 = vmatprep.subr.mxu0 0.0
    %500 = vmatpush2.msra.mxu0 0.0
    %501 = vmatprep.subr.mxu0 0.0
    %502 = vmatpush2.msra.mxu0 0.0
    %503 = vmatprep.subr.mxu0 0.0
    %504 = vmatpush2.msra.mxu0 0.0
    %505 = vmatprep.subr.mxu0 0.0
    %506 = vmatpush2.msra.mxu0 0.0
    %507 = vmatprep.subr.mxu0 0.0
    %508 = vmatpush2.msra.mxu0 0.0
    %509 = vmatprep.subr.mxu0 0.0
    %510 = vmatpush2.msra.mxu0 0.0
    %511 = vmatprep.subr.mxu0 0.0
    %512 = vmatpush2.msra.mxu0 0.0
    %513 = vmatprep.subr.mxu0 0.0
    %514 = vmatpush2.msra.mxu0 0.0
    %515 = vmatprep.subr.mxu0 0.0
    %516 = vmatpush2.msra.mxu0 0.0
    %517 = vmatprep.mubr.f32.mxu0 0.0
    %518 = vmatmul.mubr.f32.gmra.mxu0 %v451
    %v519 = vpop.f32.mrf.mxu0
    %v520 = vadd.f32 %v447, %v519
    %v521 = vpop.f32.mrf.mxu0
    %v522 = vadd.f32 %v447, %v521
    %523 = vdwg.mxu0
    %524 = vmatprep.subr.mxu0 0.0
    %525 = vmatpush1.msra.mxu0 0.0
    %526 = vmatprep.subr.mxu0 0.0
    %527 = vmatpush1.msra.mxu0 0.0
    %528 = vmatprep.subr.mxu0 0.0
    %529 = vmatpush1.msra.mxu0 0.0
    %530 = vmatprep.subr.mxu0 0.0
    %531 = vmatpush1.msra.mxu0 0.0
    %532 = vmatprep.subr.mxu0 0.0
    %533 = vmatpush1.msra.mxu0 0.0
    %534 = vmatprep.subr.mxu0 0.0
    %535 = vmatpush1.msra.mxu0 0.0
    %536 = vmatprep.subr.mxu0 0.0
    %537 = vmatpush1.msra.mxu0 0.0
    %538 = vmatprep.subr.mxu0 0.0
    %539 = vmatpush1.msra.mxu0 0.0
    %540 = vmatprep.subr.mxu0 0.0
    %541 = vmatpush1.msra.mxu0 0.0
    %542 = vmatprep.subr.mxu0 0.0
    %543 = vmatpush1.msra.mxu0 0.0
    %544 = vmatprep.subr.mxu0 0.0
    %545 = vmatpush1.msra.mxu0 0.0
    %546 = vmatprep.subr.mxu0 0.0
    %547 = vmatpush1.msra.mxu0 0.0
    %548 = vmatprep.subr.mxu0 %v441
    %549 = vmatpush1.msra.mxu0 %v439
    %550 = vmatprep.subr.mxu0 %v433
    %551 = vmatpush1.msra.mxu0 %v431
    %552 = vmatprep.subr.mxu0 %v425
    %553 = vmatpush1.msra.mxu0 %v423
    %554 = vmatprep.subr.mxu0 %v417
    %555 = vmatpush1.msra.mxu0 %v415
    %556 = vmatprep.subr.mxu0 0.0
    %557 = vmatpush2.msra.mxu0 0.0
    %558 = vmatprep.subr.mxu0 0.0
    %559 = vmatpush2.msra.mxu0 0.0
    %560 = vmatprep.subr.mxu0 0.0
    %561 = vmatpush2.msra.mxu0 0.0
    %562 = vmatprep.subr.mxu0 0.0
    %563 = vmatpush2.msra.mxu0 0.0
    %564 = vmatprep.subr.mxu0 0.0
    %565 = vmatpush2.msra.mxu0 0.0
    %566 = vmatprep.subr.mxu0 0.0
    %567 = vmatpush2.msra.mxu0 0.0
    %568 = vmatprep.subr.mxu0 0.0
    %569 = vmatpush2.msra.mxu0 0.0
    %570 = vmatprep.subr.mxu0 0.0
    %571 = vmatpush2.msra.mxu0 0.0
    %572 = vmatprep.subr.mxu0 0.0
    %573 = vmatpush2.msra.mxu0 0.0
    %574 = vmatprep.subr.mxu0 0.0
    %575 = vmatpush2.msra.mxu0 0.0
    %576 = vmatprep.subr.mxu0 0.0
    %577 = vmatpush2.msra.mxu0 0.0
    %578 = vmatprep.subr.mxu0 0.0
    %579 = vmatpush2.msra.mxu0 0.0
    %580 = vmatprep.subr.mxu0 0.0
    %581 = vmatpush2.msra.mxu0 0.0
    %582 = vmatprep.subr.mxu0 0.0
    %583 = vmatpush2.msra.mxu0 0.0
    %584 = vmatprep.subr.mxu0 0.0
    %585 = vmatpush2.msra.mxu0 0.0
    %586 = vmatprep.subr.mxu0 0.0
    %587 = vmatpush2.msra.mxu0 0.0
    %588 = vmatprep.mubr.f32.mxu0 0.0
    %589 = vmatmul.mubr.f32.gmra.mxu0 %v451
    %v590 = vpop.f32.mrf.mxu0
    %v591 = vadd.f32 %v447, %v590
    %v592 = vpop.f32.mrf.mxu0
    %v593 = vadd.f32 %v447, %v592
    %594 = vdwg.mxu0
    %v595 = vxor.u32 %v520, 2147483648
    %v596 = vxor.u32 %v522, 2147483648
    %v597 = vxor.u32 %v591, 2147483648
    %v598 = vxor.u32 %v593, 2147483648
    %v599 = vmul.f32 %v595, 1.442695
    %v600 = vpow.pop %v599
    %v601 = vmul.f32 %v596, 1.442695
    %v602 = vpow.pop %v601
    %v603 = vmul.f32 %v597, 1.442695
    %v604 = vpow.pop %v603
    %v605 = vmul.f32 %v598, 1.442695
    %v606 = vpow.pop %v605
    %v607 = vadd.f32 %v600, 1.0
    %v608 = vadd.f32 %v602, 1.0
    %v609 = vadd.f32 %v604, 1.0
    %v610 = vadd.f32 %v606, 1.0
    %v611 = vrcp.pop %v607
    %v612 = vmul.f32 1.0, %v611
    %v613 = vrcp.pop %v608
    %v614 = vmul.f32 1.0, %v613
    %v615 = vrcp.pop %v609
    %v616 = vmul.f32 1.0, %v615
    %v617 = vrcp.pop %v610
    %v618 = vmul.f32 1.0, %v617
    %v619 = vld [vmem:[%s6] sm:$0x3]
    %621 = vset.pattern.permute.xlu0 0
    %622 = vperm.xlu0 %621, %v619
    %v623 = vpop.permute.xlu0 %622
    %v625 = vmul.f32 %v612, %v623
    %v626 = vmul.f32 %v614, %v623
    %v627 = vmul.f32 %v616, %v623
    %v628 = vmul.f32 %v618, %v623
    %v633 = vcombine.low %v625, %v626
    %v634 = vcombine.low %v627, %v628
    %v636 = vunpack.c.l.s4 1983009808
    %v637 = vunpack.c.0.s8 %v636
    %v638 = vlaneseq
    %v639 = vshrl.u32 %v638, 7
    %v640 = vsub.s32 %v637, %v639
    %v641 = vrot.slane %v633, %v640
    %v643 = vunpack.c.l.s4 1983009808
    %v644 = vunpack.c.0.s8 %v643
    %v645 = vlaneseq
    %v646 = vshrl.u32 %v645, 7
    %v647 = vsub.s32 %v644, %v646
    %v648 = vrot.slane %v634, %v647
    %v649 = vcombine.low %v641, %v648
    %651 = vst [vmem:[#allocation2] sm:$0xff] %v649
    // Predicated region
    $region30: #{tpu_custom_call.1} parent=1 // pred_check
      _
    $region31: #{tpu_custom_call.1} parent=1 // pred_check_branch
      %653 = sbr.rel (0) target = $region33
    $region32: #{tpu_custom_call.1} parent=1 // pred_region
      %s655 = ssub.s32 128, 128
      %656 = vsyncadd [#allocation3], %s655
      %s658 = sshll.u32 [#allocation2], 4
      %s659 = int_to_ptr.vmem [resolvable:$true] %s658
      %661 = dma.vmem_to_hbm [thread:$0]  %s659, 128, %s7, [#allocation3]
    $region33: #{tpu_custom_call.1} parent=1 // pred_fallthru
      _
    // Predicated region
    $region34: #{tpu_custom_call.1} parent=1 // pred_check
      _
    $region35: #{tpu_custom_call.1} parent=1 // pred_check_branch
      %663 = sbr.rel (0) target = $region37
    $region36: #{tpu_custom_call.1} parent=1 // pred_region
      %664 = dma.done [#allocation3], 128
    $region37: #{tpu_custom_call.1} parent=1 // pred_fallthru
      _
    %665 = vsyncpa [#allocation3], 1

</llo_original>
